<compile_context>
chip_gen: v7x
topology: tpu7x:2x2x1
jax: 0.10.0
libtpu: 0.0.40
codegen_flags: <defaults>
</compile_context>

<pallas_src>
import jax
import jax.numpy as jnp
from jax.experimental import pallas as pl
from jax.experimental.pallas import tpu as pltpu


def mlp_kernel(x_ref, w1_ref, b1_ref, w2_ref, b2_ref, w3_ref, b3_ref, o_ref):
    nc = o_ref.shape[-1]  # true num_classes (static)

    # Cast x to bf16 in-kernel (f32 read from HBM, bf16 into the MXU).
    x = x_ref[...].astype(jnp.bfloat16)

    # Layer 1: Linear(input_size -> hidden) + ReLU (bf16 MXU, f32 accumulate)
    h1 = jnp.dot(x, w1_ref[...], preferred_element_type=jnp.float32)
    h1 = jnp.maximum(h1 + b1_ref[...], 0.0)
    # (Dropout p=0.4 -> identity in eval mode)

    # Layer 2: Linear(hidden -> hidden//2) + ReLU
    h2 = jnp.dot(h1.astype(jnp.bfloat16), w2_ref[...],
                 preferred_element_type=jnp.float32)
    h2 = jnp.maximum(h2 + b2_ref[...], 0.0)
    # (Dropout p=0.3 -> identity in eval mode)

    # Layer 3: Linear(hidden//2 -> num_classes); compute against the zero-padded
    # 128-lane weight tile, store only the valid columns (narrow masked store is
    # ~40x less writeback than a padded f32 slab).
    out = jnp.dot(h2.astype(jnp.bfloat16), w3_ref[...],
                  preferred_element_type=jnp.float32)
    out = out + b3_ref[...]
    o_ref[...] = out[:, :nc].astype(o_ref.dtype)


def prepare_params(params):
    """One-time param prep (hoisted out of the forward path):
    bf16 weights for the MXU, layer-3 weight/bias zero-padded to 128 lanes."""
    w1, b1, w2, b2, w3, b3 = params
    hidden2, num_classes = w3.shape
    n_pad = max(128, ((num_classes + 127) // 128) * 128)
    w3p = jnp.zeros((hidden2, n_pad), jnp.float32).at[:, :num_classes].set(w3)
    b3p = jnp.zeros((1, n_pad), jnp.float32).at[:, :num_classes].set(b3)
    return {
        "w1": w1.astype(jnp.bfloat16), "b1": b1.astype(jnp.float32),
        "w2": w2.astype(jnp.bfloat16), "b2": b2.astype(jnp.float32),
        "w3": w3p.astype(jnp.bfloat16), "b3": b3p,
        "num_classes": num_classes,
    }


def mlp_forward(x, prepped, *, block_batch=2048, min_grid_steps=2):
    """Fused MLP forward. x: [batch, input_size] f32. Returns [batch, num_classes] f32."""
    w1, b1 = prepped["w1"], prepped["b1"]
    w2, b2 = prepped["w2"], prepped["b2"]
    w3, b3 = prepped["w3"], prepped["b3"]
    num_classes = prepped["num_classes"]

    batch, input_size = x.shape
    hidden = w1.shape[1]
    hidden2 = w2.shape[1]
    n_pad = w3.shape[1]

    # Batch tile: as big as block_batch (amortize ~0.35us/step overhead), but
    # split so the grid has >= min_grid_steps (v7x: 2 TCs share the parallel
    # batch axis). Multiple of 8 sublanes; never larger than the batch itself.
    tb = min(block_batch, max(pl.cdiv(batch, min_grid_steps), 8))
    tb = ((tb + 7) // 8) * 8
    tb = min(tb, ((batch + 7) // 8) * 8)
    grid = (pl.cdiv(batch, tb),)  # partial trailing block handled by Pallas

    flops = 2 * batch * (input_size * hidden + hidden * hidden2 + hidden2 * n_pad)
    bytes_accessed = (batch * input_size * 4            # x (f32)
                      + w1.size * 2 + w2.size * 2 + w3.size * 2
                      + b1.size * 4 + b2.size * 4 + b3.size * 4
                      + batch * num_classes * 4)        # unpadded f32 output
    cost = pl.CostEstimate(flops=flops, transcendentals=0,
                           bytes_accessed=bytes_accessed)

    return pl.pallas_call(
        mlp_kernel,
        out_shape=jax.ShapeDtypeStruct((batch, num_classes), jnp.float32),
        grid=grid,
        in_specs=[
            pl.BlockSpec((tb, input_size), lambda i: (i, 0)),      # x tile (f32)
            pl.BlockSpec((input_size, hidden), lambda i: (0, 0)),  # w1 (resident)
            pl.BlockSpec((1, hidden), lambda i: (0, 0)),           # b1
            pl.BlockSpec((hidden, hidden2), lambda i: (0, 0)),     # w2
            pl.BlockSpec((1, hidden2), lambda i: (0, 0)),          # b2
            pl.BlockSpec((hidden2, n_pad), lambda i: (0, 0)),      # w3 (padded, resident)
            pl.BlockSpec((1, n_pad), lambda i: (0, 0)),            # b3 (padded)
        ],
        out_specs=pl.BlockSpec((tb, num_classes), lambda i: (i, 0)),
        compiler_params=pltpu.CompilerParams(
            dimension_semantics=("parallel",)),
        cost_estimate=cost,
    )(x, w1, b1, w2, b2, w3, b3)


def init_params(key, input_size, hidden_size=256, num_classes=3):
    """Deterministic init mimicking PyTorch nn.Linear default
    (U[-1/sqrt(fan_in), +1/sqrt(fan_in)]). Weights stored [in, out]."""
    dims = [(input_size, hidden_size),
            (hidden_size, hidden_size // 2),
            (hidden_size // 2, num_classes)]
    params = []
    for (fan_in, fan_out) in dims:
        key, kw, kb = jax.random.split(key, 3)
        bound = 1.0 / (fan_in ** 0.5)
        w = jax.random.uniform(kw, (fan_in, fan_out), jnp.float32, -bound, bound)
        b = jax.random.uniform(kb, (1, fan_out), jnp.float32, -bound, bound)
        params += [w, b]
    return tuple(params)


def mlp_ref_f32(x, params):
    """Pure-JAX f32 reference (eval-mode dropout = identity)."""
    w1, b1, w2, b2, w3, b3 = params
    h = jnp.maximum(x @ w1 + b1, 0.0)
    h = jnp.maximum(h @ w2 + b2, 0.0)
    return h @ w3 + b3


def mlp_ref_bf16(x, params):
    """Reference with the same bf16-MXU / f32-accumulate casting as the kernel."""
    w1, b1, w2, b2, w3, b3 = params
    bf = jnp.bfloat16
    h = jnp.dot(x.astype(bf), w1.astype(bf), preferred_element_type=jnp.float32)
    h = jnp.maximum(h + b1, 0.0)
    h = jnp.dot(h.astype(bf), w2.astype(bf), preferred_element_type=jnp.float32)
    h = jnp.maximum(h + b2, 0.0)
    return jnp.dot(h.astype(bf), w3.astype(bf),
                   preferred_element_type=jnp.float32) + b3


if __name__ == "__main__":
    key = jax.random.PRNGKey(0)
    key, kx, kx2 = jax.random.split(key, 3)

    batch = 8
    input_size = 32
    hidden_size = 256
    num_classes = 3

    params = init_params(key, input_size, hidden_size, num_classes)
    prepped = prepare_params(params)

    # Small-batch case (single grid step, partial-lane output store).
    x = jax.random.normal(kx, (batch, input_size), jnp.float32)
    out = jax.block_until_ready(mlp_forward(x, prepped))
    assert out.shape == (batch, num_classes)
    assert jnp.allclose(out, mlp_ref_bf16(x, params), atol=2e-3, rtol=2e-3)
    assert jnp.allclose(out, mlp_ref_f32(x, params), atol=5e-2, rtol=5e-2)

    # Larger, non-multiple batch: multi-step grid + partial trailing block
    # (no jnp.pad) + VMEM-resident weights.
    batch2 = 600
    x2 = jax.random.normal(kx2, (batch2, input_size), jnp.float32)
    out2 = jax.block_until_ready(mlp_forward(x2, prepped, block_batch=256))
    assert out2.shape == (batch2, num_classes)
    assert jnp.allclose(out2, mlp_ref_bf16(x2, params), atol=2e-3, rtol=2e-3)
    assert jnp.allclose(out2, mlp_ref_f32(x2, params), atol=5e-2, rtol=5e-2)

    print("KERNEL_OK")
</pallas_src>

<mosaic_0001>
module attributes {stable_mosaic.version = 11 : i64} {
  func.func @mlp_kernel(%arg0: i32, %arg1: memref<8x32xf32, #tpu.memory_space<vmem>>, %arg2: memref<32x256xbf16, #tpu.memory_space<vmem>>, %arg3: memref<1x256xf32, #tpu.memory_space<vmem>>, %arg4: memref<256x128xbf16, #tpu.memory_space<vmem>>, %arg5: memref<1x128xf32, #tpu.memory_space<vmem>>, %arg6: memref<128x128xbf16, #tpu.memory_space<vmem>>, %arg7: memref<1x128xf32, #tpu.memory_space<vmem>>, %arg8: memref<8x3xf32, #tpu.memory_space<vmem>>) attributes {dimension_semantics = [#tpu.dimension_semantics<parallel>], iteration_bounds = array<i64: 1>, scalar_prefetch = 0 : i64, scratch_operands = 0 : i64, tpu.core_type = #tpu.core_type<tc>, window_params = [{transform_indices = @transform_0, window_bounds = array<i64: 8, 32>}, {pipeline_mode = #tpu.pipeline_mode<synchronous>, transform_indices = @transform_1, window_bounds = array<i64: 32, 256>}, {pipeline_mode = #tpu.pipeline_mode<synchronous>, transform_indices = @transform_2, window_bounds = array<i64: 1, 256>}, {pipeline_mode = #tpu.pipeline_mode<synchronous>, transform_indices = @transform_3, window_bounds = array<i64: 256, 128>}, {pipeline_mode = #tpu.pipeline_mode<synchronous>, transform_indices = @transform_4, window_bounds = array<i64: 1, 128>}, {pipeline_mode = #tpu.pipeline_mode<synchronous>, transform_indices = @transform_5, window_bounds = array<i64: 128, 128>}, {pipeline_mode = #tpu.pipeline_mode<synchronous>, transform_indices = @transform_6, window_bounds = array<i64: 1, 128>}, {transform_indices = @transform_7, window_bounds = array<i64: 8, 3>}]} {
    %c0 = arith.constant 0 : index
    %c0_0 = arith.constant 0 : index
    %0 = vector.load %arg1[%c0, %c0_0] : memref<8x32xf32, #tpu.memory_space<vmem>>, vector<8x32xf32>
    %1 = arith.truncf %0 : vector<8x32xf32> to vector<8x32xbf16>
    %c0_1 = arith.constant 0 : index
    %c0_2 = arith.constant 0 : index
    %2 = vector.load %arg2[%c0_1, %c0_2] : memref<32x256xbf16, #tpu.memory_space<vmem>>, vector<32x256xbf16>
    %cst = arith.constant dense<0.000000e+00> : vector<8x256xf32>
    %3 = tpu.matmul %1, %2, %cst {dimension_numbers = #tpu.dot_dimension_numbers<[1], [0], [0], [1], [0, 0, 1, 1], [], []>} : vector<8x32xbf16>, vector<32x256xbf16>, vector<8x256xf32> -> vector<8x256xf32>
    %c0_3 = arith.constant 0 : index
    %c0_4 = arith.constant 0 : index
    %4 = vector.load %arg3[%c0_3, %c0_4] : memref<1x256xf32, #tpu.memory_space<vmem>>, vector<1x256xf32>
    %5 = vector.broadcast %4 : vector<1x256xf32> to vector<8x256xf32>
    %6 = arith.addf %3, %5 : vector<8x256xf32>
    %cst_5 = arith.constant 0.000000e+00 : f32
    %7 = vector.broadcast %cst_5 : f32 to vector<8x256xf32>
    %8 = arith.maximumf %6, %7 : vector<8x256xf32>
    %9 = arith.truncf %8 : vector<8x256xf32> to vector<8x256xbf16>
    %c0_6 = arith.constant 0 : index
    %c0_7 = arith.constant 0 : index
    %10 = vector.load %arg4[%c0_6, %c0_7] : memref<256x128xbf16, #tpu.memory_space<vmem>>, vector<256x128xbf16>
    %cst_8 = arith.constant dense<0.000000e+00> : vector<8x128xf32>
    %11 = tpu.matmul %9, %10, %cst_8 {dimension_numbers = #tpu.dot_dimension_numbers<[1], [0], [0], [1], [0, 0, 1, 1], [], []>} : vector<8x256xbf16>, vector<256x128xbf16>, vector<8x128xf32> -> vector<8x128xf32>
    %c0_9 = arith.constant 0 : index
    %c0_10 = arith.constant 0 : index
    %12 = vector.load %arg5[%c0_9, %c0_10] : memref<1x128xf32, #tpu.memory_space<vmem>>, vector<1x128xf32>
    %13 = vector.broadcast %12 : vector<1x128xf32> to vector<8x128xf32>
    %14 = arith.addf %11, %13 : vector<8x128xf32>
    %cst_11 = arith.constant 0.000000e+00 : f32
    %15 = vector.broadcast %cst_11 : f32 to vector<8x128xf32>
    %16 = arith.maximumf %14, %15 : vector<8x128xf32>
    %17 = arith.truncf %16 : vector<8x128xf32> to vector<8x128xbf16>
    %c0_12 = arith.constant 0 : index
    %c0_13 = arith.constant 0 : index
    %18 = vector.load %arg6[%c0_12, %c0_13] : memref<128x128xbf16, #tpu.memory_space<vmem>>, vector<128x128xbf16>
    %cst_14 = arith.constant dense<0.000000e+00> : vector<8x128xf32>
    %19 = tpu.matmul %17, %18, %cst_14 {dimension_numbers = #tpu.dot_dimension_numbers<[1], [0], [0], [1], [0, 0, 1, 1], [], []>} : vector<8x128xbf16>, vector<128x128xbf16>, vector<8x128xf32> -> vector<8x128xf32>
    %c0_15 = arith.constant 0 : index
    %c0_16 = arith.constant 0 : index
    %20 = vector.load %arg7[%c0_15, %c0_16] : memref<1x128xf32, #tpu.memory_space<vmem>>, vector<1x128xf32>
    %21 = vector.broadcast %20 : vector<1x128xf32> to vector<8x128xf32>
    %22 = arith.addf %19, %21 : vector<8x128xf32>
    %23 = vector.extract_strided_slice %22 {offsets = [0, 0], sizes = [8, 3], strides = [1, 1]} : vector<8x128xf32> to vector<8x3xf32>
    %c0_17 = arith.constant 0 : index
    %c0_18 = arith.constant 0 : index
    %24 = vector.load %arg8[%c0_17, %c0_18] : memref<8x3xf32, #tpu.memory_space<vmem>>, vector<8x3xf32>
    tpu.vector_store %arg8[%c0_17, %c0_18], %23 {strides = array<i32>} : memref<8x3xf32, #tpu.memory_space<vmem>>, vector<8x3xf32>,
    return
  }
  func.func @transform_0(%arg0: i32) -> (i32, i32) {
    %c0_i32 = arith.constant 0 : i32
    %c0_i32_0 = arith.constant 0 : i32
    return %arg0, %c0_i32 : i32, i32
  }
  func.func @transform_1(%arg0: i32) -> (i32, i32) {
    %c0_i32 = arith.constant 0 : i32
    %c0_i32_0 = arith.constant 0 : i32
    %c0_i32_1 = arith.constant 0 : i32
    return %c0_i32, %c0_i32_0 : i32, i32
  }
  func.func @transform_2(%arg0: i32) -> (i32, i32) {
    %c0_i32 = arith.constant 0 : i32
    %c0_i32_0 = arith.constant 0 : i32
    %c0_i32_1 = arith.constant 0 : i32
    return %c0_i32, %c0_i32_0 : i32, i32
  }
  func.func @transform_3(%arg0: i32) -> (i32, i32) {
    %c0_i32 = arith.constant 0 : i32
    %c0_i32_0 = arith.constant 0 : i32
    %c0_i32_1 = arith.constant 0 : i32
    return %c0_i32, %c0_i32_0 : i32, i32
  }
  func.func @transform_4(%arg0: i32) -> (i32, i32) {
    %c0_i32 = arith.constant 0 : i32
    %c0_i32_0 = arith.constant 0 : i32
    %c0_i32_1 = arith.constant 0 : i32
    return %c0_i32, %c0_i32_0 : i32, i32
  }
  func.func @transform_5(%arg0: i32) -> (i32, i32) {
    %c0_i32 = arith.constant 0 : i32
    %c0_i32_0 = arith.constant 0 : i32
    %c0_i32_1 = arith.constant 0 : i32
    return %c0_i32, %c0_i32_0 : i32, i32
  }
  func.func @transform_6(%arg0: i32) -> (i32, i32) {
    %c0_i32 = arith.constant 0 : i32
    %c0_i32_0 = arith.constant 0 : i32
    %c0_i32_1 = arith.constant 0 : i32
    return %c0_i32, %c0_i32_0 : i32, i32
  }
  func.func @transform_7(%arg0: i32) -> (i32, i32) {
    %c0_i32 = arith.constant 0 : i32
    %c0_i32_0 = arith.constant 0 : i32
    return %arg0, %c0_i32 : i32, i32
  }
}

</mosaic_0001>

<llo_original>
// kernel: tpu_custom_call.1
$region0: #{tpu_custom_call.1}
  #allocation0 [shape = 'u32[]', space=smem, size = 0x4, offset = 0x4, fixed_abs, tag = 'smem constant byte address 0x4 - core index']
  #allocation1 [shape = 'u32[144,128]{1,0:T(1,128)}', space=vmem, size = 0x12000, scoped, tag = 'internal scratch']
  %s0 = inlined_call_operand.hbm [shape: f32[8,32], index: 0, kind: input, shape index: {}]
  %s1 = inlined_call_operand.hbm [shape: bf16[32,256], index: 1, kind: input, shape index: {}]
  %s2 = inlined_call_operand.vmem [shape: f32[1,256], index: 2, kind: input, shape index: {}]
  %s3 = inlined_call_operand.hbm [shape: bf16[256,128], index: 3, kind: input, shape index: {}]
  %s4 = inlined_call_operand.vmem [shape: f32[1,128], index: 4, kind: input, shape index: {}]
  %s5 = inlined_call_operand.hbm [shape: bf16[128,128], index: 5, kind: input, shape index: {}]
  %s6 = inlined_call_operand.vmem [shape: f32[1,128], index: 6, kind: input, shape index: {}]
  %s7 = inlined_call_operand.vmem [shape: f32[8,3], index: 7, kind: output, shape index: {}]
  %s8 = sld [smem:[#allocation0]]
  $region54: #{tpu_custom_call.1} parent=0
    _
  %s10 = ssub.s32 1, %s8
  %s11 = scalar_select 0, %s10, %s8
  $region1: #{tpu_custom_call.1} parent=0
    #allocation2 [shape = 'u8[4096]{0}', space=vmem, size = 0x1000, scoped, tag = 'input window, operand 0, single buffered']
    #allocation3 [shape = 's32[1]{0}', space=sflag, size = 0x4, scoped, tag = 'scoped memory for tpu_custom_call.1']
    #allocation4 [shape = 'u8[16384]{0}', space=vmem, size = 0x4000, scoped, tag = 'input window, operand 1, single buffered']
    #allocation5 [shape = 's32[1]{0}', space=sflag, size = 0x4, scoped, tag = 'scoped memory for tpu_custom_call.1']
    #allocation6 [shape = 'u8[65536]{0}', space=vmem, size = 0x10000, scoped, tag = 'input window, operand 3, single buffered']
    #allocation7 [shape = 'u8[32768]{0}', space=vmem, size = 0x8000, scoped, tag = 'input window, operand 5, single buffered']
    #allocation8 [shape = 's32[1]{0}', space=sflag, size = 0x4, scoped, tag = 'scoped memory for tpu_custom_call.1']
    %12 = vsyncpa [#allocation3], 0
    %13 = vsyncpa [#allocation5], 0
    %14 = vsyncpa [#allocation8], 0
    // Predicated region
    $region2: #{tpu_custom_call.1} parent=1 // pred_check
      _
    $region3: #{tpu_custom_call.1} parent=1 // pred_check_branch
      %16 = sbr.rel (0) target = $region5
    $region4: #{tpu_custom_call.1} parent=1 // pred_region
      %s18 = ssub.s32 128, 128
      %19 = vsyncadd [#allocation3], %s18
      %s21 = sshll.u32 [#allocation2], 4
      %s22 = int_to_ptr.vmem [resolvable:$true] %s21
      %24 = dma.hbm_to_vmem [thread:$0]  %s0, 128, %s22, [#allocation3]
    $region5: #{tpu_custom_call.1} parent=1 // pred_fallthru
      _
    // Predicated region
    $region6: #{tpu_custom_call.1} parent=1 // pred_check
      _
    $region7: #{tpu_custom_call.1} parent=1 // pred_check_branch
      %26 = sbr.rel (0) target = $region9
    $region8: #{tpu_custom_call.1} parent=1 // pred_region
      %s28 = ssub.s32 512, 512
      %29 = vsyncadd [#allocation5], %s28
      %s30 = sshll.u32 [#allocation4], 4
      %s31 = int_to_ptr.vmem [resolvable:$true] %s30
      %36 = dma.hbm_to_vmem [thread:$0]  %s1, 512, %s31, [#allocation5], 128, 128, 8
    $region9: #{tpu_custom_call.1} parent=1 // pred_fallthru
      _
    // Predicated region
    $region10: #{tpu_custom_call.1} parent=1 // pred_check
      _
    $region11: #{tpu_custom_call.1} parent=1 // pred_check_branch
      %38 = sbr.rel (0) target = $region13
    $region12: #{tpu_custom_call.1} parent=1 // pred_region
      _
    $region13: #{tpu_custom_call.1} parent=1 // pred_fallthru
      _
    // Predicated region
    $region14: #{tpu_custom_call.1} parent=1 // pred_check
      _
    $region15: #{tpu_custom_call.1} parent=1 // pred_check_branch
      %40 = sbr.rel (0) target = $region17
    $region16: #{tpu_custom_call.1} parent=1 // pred_region
      %s42 = ssub.s32 2048, 2048
      %43 = vsyncadd [#allocation5], %s42
      %s44 = sshll.u32 [#allocation6], 4
      %s45 = int_to_ptr.vmem [resolvable:$true] %s44
      %50 = dma.hbm_to_vmem [thread:$0]  %s3, 2048, %s45, [#allocation5], 64, 64, 4
    $region17: #{tpu_custom_call.1} parent=1 // pred_fallthru
      _
    // Predicated region
    $region18: #{tpu_custom_call.1} parent=1 // pred_check
      _
    $region19: #{tpu_custom_call.1} parent=1 // pred_check_branch
      %52 = sbr.rel (0) target = $region21
    $region20: #{tpu_custom_call.1} parent=1 // pred_region
      _
    $region21: #{tpu_custom_call.1} parent=1 // pred_fallthru
      _
    // Predicated region
    $region22: #{tpu_custom_call.1} parent=1 // pred_check
      _
    $region23: #{tpu_custom_call.1} parent=1 // pred_check_branch
      %54 = sbr.rel (0) target = $region25
    $region24: #{tpu_custom_call.1} parent=1 // pred_region
      %s56 = ssub.s32 1024, 1024
      %57 = vsyncadd [#allocation8], %s56
      %s58 = sshll.u32 [#allocation7], 4
      %s59 = int_to_ptr.vmem [resolvable:$true] %s58
      %64 = dma.hbm_to_vmem [thread:$0]  %s5, 1024, %s59, [#allocation8], 64, 64, 4
    $region25: #{tpu_custom_call.1} parent=1 // pred_fallthru
      _
    // Predicated region
    $region26: #{tpu_custom_call.1} parent=1 // pred_check
      _
    $region27: #{tpu_custom_call.1} parent=1 // pred_check_branch
      %66 = sbr.rel (0) target = $region29
    $region28: #{tpu_custom_call.1} parent=1 // pred_region
      _
    $region29: #{tpu_custom_call.1} parent=1 // pred_fallthru
      _
    // Predicated region
    $region30: #{tpu_custom_call.1} parent=1 // pred_check
      _
    $region31: #{tpu_custom_call.1} parent=1 // pred_check_branch
      %68 = sbr.rel (0) target = $region33
    $region32: #{tpu_custom_call.1} parent=1 // pred_region
      %69 = dma.done [#allocation3], 128
    $region33: #{tpu_custom_call.1} parent=1 // pred_fallthru
      _
    // Predicated region
    $region34: #{tpu_custom_call.1} parent=1 // pred_check
      _
    $region35: #{tpu_custom_call.1} parent=1 // pred_check_branch
      %71 = sbr.rel (0) target = $region37
    $region36: #{tpu_custom_call.1} parent=1 // pred_region
      %72 = dma.done [#allocation5], 512
    $region37: #{tpu_custom_call.1} parent=1 // pred_fallthru
      _
    // Predicated region
    $region38: #{tpu_custom_call.1} parent=1 // pred_check
      _
    $region39: #{tpu_custom_call.1} parent=1 // pred_check_branch
      %74 = sbr.rel (0) target = $region41
    $region40: #{tpu_custom_call.1} parent=1 // pred_region
      %75 = dma.done [#allocation5], 2048
    $region41: #{tpu_custom_call.1} parent=1 // pred_fallthru
      _
    // Predicated region
    $region42: #{tpu_custom_call.1} parent=1 // pred_check
      _
    $region43: #{tpu_custom_call.1} parent=1 // pred_check_branch
      %77 = sbr.rel (0) target = $region45
    $region44: #{tpu_custom_call.1} parent=1 // pred_region
      %78 = dma.done [#allocation8], 1024
    $region45: #{tpu_custom_call.1} parent=1 // pred_fallthru
      _
    %v80 = vld [vmem:[#allocation2] sm:$0xff]
    %v81 = vpack.c.bf16 %v80, %v80
    %v82 = vld [vmem:[#allocation4] sm:$0xff]
    %v83 = vld [vmem:[#allocation4 + $0x8] sm:$0xff]
    %v84 = vld [vmem:[#allocation4 + $0x10] sm:$0xff]
    %v85 = vld [vmem:[#allocation4 + $0x18] sm:$0xff]
    %v86 = vld [vmem:[%s2] sm:$0x3]
    %v88 = vlaneseq
    %v89 = vshrl.u32 %v88, 7
    %v90 = vsub.s32 0, %v89
    %v91 = vrot.slane %v86, %v90
    %v92 = vlaneseq
    %v93 = vshrl.u32 %v92, 7
    %v94 = vsub.s32 1, %v93
    %v95 = vrot.slane %v86, %v94
    %v102 = vunpack.c.l.b16 %v82
    %v103 = vunpack.c.h.b16 %v82
    %v104 = vunpack.c.l.b16 %v83
    %v105 = vunpack.c.h.b16 %v83
    %v106 = vunpack.c.l.b16 %v84
    %v107 = vunpack.c.h.b16 %v84
    %v108 = vunpack.c.l.b16 %v85
    %v109 = vunpack.c.h.b16 %v85
    %v110 = vpack.c.b16 %v104, %v102
    %v111 = vpack.c.b16 %v105, %v103
    %v112 = vpack.c.b16 %v108, %v106
    %v113 = vpack.c.b16 %v109, %v107
    %vm118 = vcmask 261120
    %v120 = vsel %vm118, %v81, 0
    %122 = vmatprep.subr.bf16.mxu0 %v111
    %123 = vmatpush1.bf16.msra.mxu0 %v110
    %124 = vmatprep.subr.bf16.mxu0 %v113
    %125 = vmatpush1.bf16.msra.mxu0 %v112
    %126 = vmatprep.subr.bf16.mxu0 0
    %127 = vmatpush1.bf16.msra.mxu0 0
    %128 = vmatprep.subr.bf16.mxu0 0
    %129 = vmatpush1.bf16.msra.mxu0 0
    %130 = vmatprep.subr.bf16.mxu0 0
    %131 = vmatpush1.bf16.msra.mxu0 0
    %132 = vmatprep.subr.bf16.mxu0 0
    %133 = vmatpush1.bf16.msra.mxu0 0
    %134 = vmatprep.subr.bf16.mxu0 0
    %135 = vmatpush1.bf16.msra.mxu0 0
    %136 = vmatprep.subr.bf16.mxu0 0
    %137 = vmatpush1.bf16.msra.mxu0 0
    %138 = vmatprep.subr.bf16.mxu0 0
    %139 = vmatpush1.bf16.msra.mxu0 0
    %140 = vmatprep.subr.bf16.mxu0 0
    %141 = vmatpush1.bf16.msra.mxu0 0
    %142 = vmatprep.subr.bf16.mxu0 0
    %143 = vmatpush1.bf16.msra.mxu0 0
    %144 = vmatprep.subr.bf16.mxu0 0
    %145 = vmatpush1.bf16.msra.mxu0 0
    %146 = vmatprep.subr.bf16.mxu0 0
    %147 = vmatpush1.bf16.msra.mxu0 0
    %148 = vmatprep.subr.bf16.mxu0 0
    %149 = vmatpush1.bf16.msra.mxu0 0
    %150 = vmatprep.subr.bf16.mxu0 0
    %151 = vmatpush1.bf16.msra.mxu0 0
    %152 = vmatprep.subr.bf16.mxu0 0
    %153 = vmatpush1.bf16.msra.mxu0 0
    %154 = vmatprep.mubr.bf16.mxu0 0
    %155 = vmatmul.mubr.bf16.gmra.mrb[0].mxu0 %v120
    %v156 = vpop.f32.mrb[0].mxu0
    %v157 = vadd.f32 %v91, %v156
    %v158 = vpop.f32.mrb[0].mxu0
    %v159 = vadd.f32 %v95, %v158
    %v160 = vpop.f32.mrb[0].mxu0
    %v161 = vpop.f32.mrb[0].mxu0
    %162 = vdwg.mxu0
    %v163 = vmax.f32 %v157, 0.0
    %v164 = vmax.f32 %v159, 0.0
    %v165 = vpack.c.bf16 %v163, %v163
    %v166 = vpack.c.bf16 %v164, %v164
    %v167 = vld [vmem:[#allocation6] sm:$0xf]
    %v168 = vld [vmem:[#allocation6 + $0x4] sm:$0xf]
    %v169 = vld [vmem:[#allocation6 + $0x8] sm:$0xf]
    %v170 = vld [vmem:[#allocation6 + $0xc] sm:$0xf]
    %v171 = vld [vmem:[#allocation6 + $0x10] sm:$0xf]
    %v172 = vld [vmem:[#allocation6 + $0x14] sm:$0xf]
    %v173 = vld [vmem:[#allocation6 + $0x18] sm:$0xf]
    %v174 = vld [vmem:[#allocation6 + $0x1c] sm:$0xf]
    %v175 = vld [vmem:[#allocation6 + $0x20] sm:$0xf]
    %v176 = vld [vmem:[#allocation6 + $0x24] sm:$0xf]
    %v177 = vld [vmem:[#allocation6 + $0x28] sm:$0xf]
    %v178 = vld [vmem:[#allocation6 + $0x2c] sm:$0xf]
    %v179 = vld [vmem:[#allocation6 + $0x30] sm:$0xf]
    %v180 = vld [vmem:[#allocation6 + $0x34] sm:$0xf]
    %v181 = vld [vmem:[#allocation6 + $0x38] sm:$0xf]
    %v182 = vld [vmem:[#allocation6 + $0x3c] sm:$0xf]
    %v183 = vld [vmem:[#allocation6 + $0x40] sm:$0xf]
    %v184 = vld [vmem:[#allocation6 + $0x44] sm:$0xf]
    %v185 = vld [vmem:[#allocation6 + $0x48] sm:$0xf]
    %v186 = vld [vmem:[#allocation6 + $0x4c] sm:$0xf]
    %v187 = vld [vmem:[#allocation6 + $0x50] sm:$0xf]
    %v188 = vld [vmem:[#allocation6 + $0x54] sm:$0xf]
    %v189 = vld [vmem:[#allocation6 + $0x58] sm:$0xf]
    %v190 = vld [vmem:[#allocation6 + $0x5c] sm:$0xf]
    %v191 = vld [vmem:[#allocation6 + $0x60] sm:$0xf]
    %v192 = vld [vmem:[#allocation6 + $0x64] sm:$0xf]
    %v193 = vld [vmem:[#allocation6 + $0x68] sm:$0xf]
    %v194 = vld [vmem:[#allocation6 + $0x6c] sm:$0xf]
    %v195 = vld [vmem:[#allocation6 + $0x70] sm:$0xf]
    %v196 = vld [vmem:[#allocation6 + $0x74] sm:$0xf]
    %v197 = vld [vmem:[#allocation6 + $0x78] sm:$0xf]
    %v198 = vld [vmem:[#allocation6 + $0x7c] sm:$0xf]
    %v199 = vld [vmem:[%s4] sm:$0x1]
    %v201 = vlaneseq
    %v202 = vshrl.u32 %v201, 7
    %v203 = vsub.s32 0, %v202
    %v204 = vrot.slane %v199, %v203
    %v238 = vunpack.c.l.b16 %v167
    %v239 = vunpack.c.l.b16 %v168
    %v240 = vunpack.c.l.b16 %v169
    %v241 = vunpack.c.l.b16 %v170
    %v242 = vunpack.c.l.b16 %v171
    %v243 = vunpack.c.l.b16 %v172
    %v244 = vunpack.c.l.b16 %v173
    %v245 = vunpack.c.l.b16 %v174
    %v246 = vunpack.c.l.b16 %v175
    %v247 = vunpack.c.l.b16 %v176
    %v248 = vunpack.c.l.b16 %v177
    %v249 = vunpack.c.l.b16 %v178
    %v250 = vunpack.c.l.b16 %v179
    %v251 = vunpack.c.l.b16 %v180
    %v252 = vunpack.c.l.b16 %v181
    %v253 = vunpack.c.l.b16 %v182
    %v254 = vunpack.c.l.b16 %v183
    %v255 = vunpack.c.l.b16 %v184
    %v256 = vunpack.c.l.b16 %v185
    %v257 = vunpack.c.l.b16 %v186
    %v258 = vunpack.c.l.b16 %v187
    %v259 = vunpack.c.l.b16 %v188
    %v260 = vunpack.c.l.b16 %v189
    %v261 = vunpack.c.l.b16 %v190
    %v262 = vunpack.c.l.b16 %v191
    %v263 = vunpack.c.l.b16 %v192
    %v264 = vunpack.c.l.b16 %v193
    %v265 = vunpack.c.l.b16 %v194
    %v266 = vunpack.c.l.b16 %v195
    %v267 = vunpack.c.l.b16 %v196
    %v268 = vunpack.c.l.b16 %v197
    %v269 = vunpack.c.l.b16 %v198
    %v270 = vpack.c.b16 %v239, %v238
    %v271 = vpack.c.b16 %v241, %v240
    %v272 = vpack.c.b16 %v243, %v242
    %v273 = vpack.c.b16 %v245, %v244
    %v274 = vpack.c.b16 %v247, %v246
    %v275 = vpack.c.b16 %v249, %v248
    %v276 = vpack.c.b16 %v251, %v250
    %v277 = vpack.c.b16 %v253, %v252
    %v278 = vpack.c.b16 %v255, %v254
    %v279 = vpack.c.b16 %v257, %v256
    %v280 = vpack.c.b16 %v259, %v258
    %v281 = vpack.c.b16 %v261, %v260
    %v282 = vpack.c.b16 %v263, %v262
    %v283 = vpack.c.b16 %v265, %v264
    %v284 = vpack.c.b16 %v267, %v266
    %v285 = vpack.c.b16 %v269, %v268
    %302 = vmatprep.subr.bf16.mxu0 0
    %303 = vmatpush1.bf16.msra.mxu0 %v270
    %304 = vmatprep.subr.bf16.mxu0 0
    %305 = vmatpush1.bf16.msra.mxu0 %v271
    %306 = vmatprep.subr.bf16.mxu0 0
    %307 = vmatpush1.bf16.msra.mxu0 %v272
    %308 = vmatprep.subr.bf16.mxu0 0
    %309 = vmatpush1.bf16.msra.mxu0 %v273
    %310 = vmatprep.subr.bf16.mxu0 0
    %311 = vmatpush1.bf16.msra.mxu0 %v274
    %312 = vmatprep.subr.bf16.mxu0 0
    %313 = vmatpush1.bf16.msra.mxu0 %v275
    %314 = vmatprep.subr.bf16.mxu0 0
    %315 = vmatpush1.bf16.msra.mxu0 %v276
    %316 = vmatprep.subr.bf16.mxu0 0
    %317 = vmatpush1.bf16.msra.mxu0 %v277
    %318 = vmatprep.subr.bf16.mxu0 0
    %319 = vmatpush1.bf16.msra.mxu0 %v278
    %320 = vmatprep.subr.bf16.mxu0 0
    %321 = vmatpush1.bf16.msra.mxu0 %v279
    %322 = vmatprep.subr.bf16.mxu0 0
    %323 = vmatpush1.bf16.msra.mxu0 %v280
    %324 = vmatprep.subr.bf16.mxu0 0
    %325 = vmatpush1.bf16.msra.mxu0 %v281
    %326 = vmatprep.subr.bf16.mxu0 0
    %327 = vmatpush1.bf16.msra.mxu0 %v282
    %328 = vmatprep.subr.bf16.mxu0 0
    %329 = vmatpush1.bf16.msra.mxu0 %v283
    %330 = vmatprep.subr.bf16.mxu0 0
    %331 = vmatpush1.bf16.msra.mxu0 %v284
    %332 = vmatprep.subr.bf16.mxu0 0
    %333 = vmatpush1.bf16.msra.mxu0 %v285
    %334 = vmatprep.mubr.bf16.mxu0 %v166
    %335 = vmatmul.mubr.bf16.gmra.mrb[0].mxu0 %v165
    %v336 = vpop.f32.mrb[0].mxu0
    %v337 = vadd.f32 %v204, %v336
    %v338 = vpop.f32.mrb[0].mxu0
    %v339 = vpop.f32.mrb[0].mxu0
    %v340 = vpop.f32.mrb[0].mxu0
    %341 = vdwg.mxu0
    %v342 = vmax.f32 %v337, 0.0
    %v343 = vpack.c.bf16 %v342, %v342
    %v344 = vld [vmem:[#allocation7] sm:$0xf]
    %v345 = vld [vmem:[#allocation7 + $0x4] sm:$0xf]
    %v346 = vld [vmem:[#allocation7 + $0x8] sm:$0xf]
    %v347 = vld [vmem:[#allocation7 + $0xc] sm:$0xf]
    %v348 = vld [vmem:[#allocation7 + $0x10] sm:$0xf]
    %v349 = vld [vmem:[#allocation7 + $0x14] sm:$0xf]
    %v350 = vld [vmem:[#allocation7 + $0x18] sm:$0xf]
    %v351 = vld [vmem:[#allocation7 + $0x1c] sm:$0xf]
    %v352 = vld [vmem:[#allocation7 + $0x20] sm:$0xf]
    %v353 = vld [vmem:[#allocation7 + $0x24] sm:$0xf]
    %v354 = vld [vmem:[#allocation7 + $0x28] sm:$0xf]
    %v355 = vld [vmem:[#allocation7 + $0x2c] sm:$0xf]
    %v356 = vld [vmem:[#allocation7 + $0x30] sm:$0xf]
    %v357 = vld [vmem:[#allocation7 + $0x34] sm:$0xf]
    %v358 = vld [vmem:[#allocation7 + $0x38] sm:$0xf]
    %v359 = vld [vmem:[#allocation7 + $0x3c] sm:$0xf]
    %v360 = vld [vmem:[%s6] sm:$0x1]
    %v362 = vlaneseq
    %v363 = vshrl.u32 %v362, 7
    %v364 = vsub.s32 0, %v363
    %v365 = vrot.slane %v360, %v364
    %v383 = vunpack.c.l.b16 %v344
    %v384 = vunpack.c.l.b16 %v345
    %v385 = vunpack.c.l.b16 %v346
    %v386 = vunpack.c.l.b16 %v347
    %v387 = vunpack.c.l.b16 %v348
    %v388 = vunpack.c.l.b16 %v349
    %v389 = vunpack.c.l.b16 %v350
    %v390 = vunpack.c.l.b16 %v351
    %v391 = vunpack.c.l.b16 %v352
    %v392 = vunpack.c.l.b16 %v353
    %v393 = vunpack.c.l.b16 %v354
    %v394 = vunpack.c.l.b16 %v355
    %v395 = vunpack.c.l.b16 %v356
    %v396 = vunpack.c.l.b16 %v357
    %v397 = vunpack.c.l.b16 %v358
    %v398 = vunpack.c.l.b16 %v359
    %v399 = vpack.c.b16 %v384, %v383
    %v400 = vpack.c.b16 %v386, %v385
    %v401 = vpack.c.b16 %v388, %v387
    %v402 = vpack.c.b16 %v390, %v389
    %v403 = vpack.c.b16 %v392, %v391
    %v404 = vpack.c.b16 %v394, %v393
    %v405 = vpack.c.b16 %v396, %v395
    %v406 = vpack.c.b16 %v398, %v397
    %415 = vmatprep.subr.bf16.mxu0 0
    %416 = vmatpush1.bf16.msra.mxu0 %v399
    %417 = vmatprep.subr.bf16.mxu0 0
    %418 = vmatpush1.bf16.msra.mxu0 %v400
    %419 = vmatprep.subr.bf16.mxu0 0
    %420 = vmatpush1.bf16.msra.mxu0 %v401
    %421 = vmatprep.subr.bf16.mxu0 0
    %422 = vmatpush1.bf16.msra.mxu0 %v402
    %423 = vmatprep.subr.bf16.mxu0 0
    %424 = vmatpush1.bf16.msra.mxu0 %v403
    %425 = vmatprep.subr.bf16.mxu0 0
    %426 = vmatpush1.bf16.msra.mxu0 %v404
    %427 = vmatprep.subr.bf16.mxu0 0
    %428 = vmatpush1.bf16.msra.mxu0 %v405
    %429 = vmatprep.subr.bf16.mxu0 0
    %430 = vmatpush1.bf16.msra.mxu0 %v406
    %431 = vmatprep.subr.bf16.mxu0 0
    %432 = vmatpush1.bf16.msra.mxu0 0
    %433 = vmatprep.subr.bf16.mxu0 0
    %434 = vmatpush1.bf16.msra.mxu0 0
    %435 = vmatprep.subr.bf16.mxu0 0
    %436 = vmatpush1.bf16.msra.mxu0 0
    %437 = vmatprep.subr.bf16.mxu0 0
    %438 = vmatpush1.bf16.msra.mxu0 0
    %439 = vmatprep.subr.bf16.mxu0 0
    %440 = vmatpush1.bf16.msra.mxu0 0
    %441 = vmatprep.subr.bf16.mxu0 0
    %442 = vmatpush1.bf16.msra.mxu0 0
    %443 = vmatprep.subr.bf16.mxu0 0
    %444 = vmatpush1.bf16.msra.mxu0 0
    %445 = vmatprep.subr.bf16.mxu0 0
    %446 = vmatpush1.bf16.msra.mxu0 0
    %447 = vmatprep.mubr.bf16.mxu0 0
    %448 = vmatmul.mubr.bf16.gmra.mrb[0].mxu0 %v343
    %v449 = vpop.f32.mrb[0].mxu0
    %v450 = vadd.f32 %v365, %v449
    %v451 = vpop.f32.mrb[0].mxu0
    %v452 = vpop.f32.mrb[0].mxu0
    %v453 = vpop.f32.mrb[0].mxu0
    %454 = vdwg.mxu0
    %vm455 = vcmask 23552
    %456 = vst.msk [vmem:[%s7] sm:$0xff] %vm455, %v450
    // Predicated region
    $region46: #{tpu_custom_call.1} parent=1 // pred_check
      _
    $region47: #{tpu_custom_call.1} parent=1 // pred_check_branch
      %458 = sbr.rel (0) target = $region49
    $region48: #{tpu_custom_call.1} parent=1 // pred_region
      _
    $region49: #{tpu_custom_call.1} parent=1 // pred_fallthru
      _
    // Predicated region
    $region50: #{tpu_custom_call.1} parent=1 // pred_check
      _
    $region51: #{tpu_custom_call.1} parent=1 // pred_check_branch
      %460 = sbr.rel (0) target = $region53
    $region52: #{tpu_custom_call.1} parent=1 // pred_region
      _
    $region53: #{tpu_custom_call.1} parent=1 // pred_fallthru
      _
    %461 = vsyncpa [#allocation3], 1
    %462 = vsyncpa [#allocation5], 1
    %463 = vsyncpa [#allocation8], 1

</llo_original>
